<compile_context>
chip_gen: v6e
topology: v6e:2x2x1
jax: 0.10.0
libtpu: 0.0.40
codegen_flags: <defaults>
</compile_context>

<pallas_src>
import jax
import jax.numpy as jnp
from jax.experimental import pallas as pl
from jax.experimental.pallas import tpu as pltpu

LANE = 128
SUBLANE = 8


def _round_up(x, m):
    return ((x + m - 1) // m) * m


def _choose_batch_tiling(batch, tm_max):
    """Pick (tm, b_pad): sublane-aligned batch tile and padded batch size."""
    tm_max = max(SUBLANE, (int(tm_max) // SUBLANE) * SUBLANE)  # sanitize tm
    tm = SUBLANE
    for cand in (1024, 512, 256, 128, 64, 32, 16, 8):
        if cand > tm_max:
            continue
        b_pad = _round_up(batch, cand)
        # Largest tile whose padding waste stays <= 12.5% of the padded batch.
        if (b_pad - batch) * 8 <= b_pad:
            tm = cand
            break
    b_pad = _round_up(batch, tm)
    # v7x has 2 TensorCores: keep at least 2 grid steps when the batch allows
    # it so the "parallel" batch axis actually shards across both cores.
    while tm > SUBLANE and b_pad // tm < 2:
        tm //= 2
        b_pad = _round_up(batch, tm)
    return tm, b_pad


def _mlp_kernel(x_ref, w1_ref, b1_ref, w2_ref, b2_ref, o_ref):
    # Layer 1: (tm, f_in) @ (f_in, mid_p).  bf16 cast in-register (VPU),
    # MXU does bf16 x bf16 -> f32 accumulation.
    x = x_ref[...].astype(jnp.bfloat16)
    h = jnp.dot(x, w1_ref[...], preferred_element_type=jnp.float32)
    h = jnp.maximum(h + b1_ref[...], 0.0)
    # Layer 2: (tm, mid_p) @ (mid_p, f_out); bias + ReLU epilogue in f32.
    o = jnp.dot(h.astype(jnp.bfloat16), w2_ref[...],
                preferred_element_type=jnp.float32)
    o = jnp.maximum(o + b2_ref[...], 0.0)
    o_ref[...] = o.astype(o_ref.dtype)


def prepare_linear_m_params(w1, b1, w2, b2):
    """One-time param prep (run at init, NOT per forward).

    w1: (mid, f_in), b1: (mid,), w2: (out, mid), b2: (out,)  -- PyTorch layout.
    Transposes to (in, out), zero-pads only the hidden dim to 128 lanes and
    casts weights to bf16 for the MXU; biases stay f32 for the epilogue.
    """
    mid, f_in = w1.shape
    f_out, mid2 = w2.shape
    assert mid2 == mid, "w2 inner dim must match w1 outer dim"
    mid_p = _round_up(mid, LANE)

    w1_t = jnp.zeros((f_in, mid_p), jnp.float32).at[:, :mid].set(w1.T)
    w2_t = jnp.zeros((mid_p, f_out), jnp.float32).at[:mid, :].set(w2.T)
    b1_r = jnp.zeros((1, mid_p), jnp.float32).at[0, :mid].set(b1)
    b2_r = jnp.asarray(b2, jnp.float32).reshape(1, f_out)

    return {
        "w1": w1_t.astype(jnp.bfloat16),   # (f_in, mid_p)   bf16
        "b1": b1_r,                        # (1, mid_p)      f32
        "w2": w2_t.astype(jnp.bfloat16),   # (mid_p, f_out)  bf16
        "b2": b2_r,                        # (1, f_out)      f32
        "in_size": int(f_in),
        "out_size": int(f_out),
    }


def linear_m_forward(x_real, params, *, tm=1024):
    """LinearM forward: ReLU(ReLU(x @ W1^T + b1) @ W2^T + b2).

    x_real: (B, f_in) float32.  `params` from prepare_linear_m_params.
    Returns (B, out_size) float32.
    """
    B, f_in = x_real.shape
    assert f_in == params["in_size"], "input feature size mismatch"
    w1, b1, w2, b2 = params["w1"], params["b1"], params["w2"], params["b2"]
    mid_p = w1.shape[1]
    f_out = params["out_size"]

    tm, b_pad = _choose_batch_tiling(B, tm)
    grid = (b_pad // tm,)

    # Only pad batch rows when the tile does not divide B (f32, no lane pad).
    x_in = x_real if b_pad == B else jnp.pad(x_real, ((0, b_pad - B), (0, 0)))

    flops = 2 * b_pad * (f_in * mid_p + mid_p * f_out)
    bytes_accessed = (x_in.size * x_in.dtype.itemsize
                      + (w1.size + w2.size) * 2
                      + (b1.size + b2.size) * 4
                      + b_pad * f_out * 4)

    # Tight VMEM budget: double-buffered x/out tiles + resident weights/biases
    # + hidden activation, with 2x slack.  A few MiB in practice.
    tile_bytes = (2 * tm * f_in * 4           # x tiles (f32, double-buffered)
                  + 2 * tm * f_out * 4        # out tiles (f32, double-buffered)
                  + tm * mid_p * 4            # hidden activation (f32)
                  + 2 * (w1.size + w2.size) * 2
                  + 2 * (b1.size + b2.size) * 4)
    vmem_limit = int(min(max(2 * tile_bytes, 1 << 20), 32 << 20))

    out = pl.pallas_call(
        _mlp_kernel,
        out_shape=jax.ShapeDtypeStruct((b_pad, f_out), jnp.float32),
        grid=grid,
        in_specs=[
            pl.BlockSpec((tm, f_in), lambda i: (i, 0)),        # x tile (raw f32)
            pl.BlockSpec((f_in, mid_p), lambda i: (0, 0)),     # W1 (resident)
            pl.BlockSpec((1, mid_p), lambda i: (0, 0)),        # b1 (resident)
            pl.BlockSpec((mid_p, f_out), lambda i: (0, 0)),    # W2 (resident)
            pl.BlockSpec((1, f_out), lambda i: (0, 0)),        # b2 (resident)
        ],
        out_specs=pl.BlockSpec((tm, f_out), lambda i: (i, 0)),
        compiler_params=pltpu.CompilerParams(
            dimension_semantics=("parallel",),
            vmem_limit_bytes=vmem_limit,
        ),
        cost_estimate=pl.CostEstimate(
            flops=flops, transcendentals=0, bytes_accessed=bytes_accessed),
    )(x_in, w1, b1, w2, b2)

    return out if b_pad == B else out[:B]


def _torch_like_linear_init(key, out_features, in_features):
    """Matches PyTorch nn.Linear default init:
    uniform(-1/sqrt(fan_in), 1/sqrt(fan_in)) for weight and bias."""
    kw, kb = jax.random.split(key)
    bound = 1.0 / jnp.sqrt(jnp.float32(in_features))
    w = jax.random.uniform(kw, (out_features, in_features), jnp.float32,
                           minval=-bound, maxval=bound)
    b = jax.random.uniform(kb, (out_features,), jnp.float32,
                           minval=-bound, maxval=bound)
    return w, b


if __name__ == "__main__":
    # params consistent with LinearM.__init__
    module_params = {
        "real_features_size": 16,
        "num_categoical": 8,
        "mid_features": 32,
        "out_size": 16,
    }
    f_in = module_params["real_features_size"] + module_params["num_categoical"]  # 24
    mid = module_params["mid_features"]                                           # 32
    f_out = module_params["out_size"]                                             # 16
    batch = 8

    key = jax.random.PRNGKey(0)
    kx, k1, k2 = jax.random.split(key, 3)

    # forward(x) takes a dict and uses x['real_vector']
    x = {"real_vector": jax.random.normal(kx, (batch, f_in), jnp.float32)}

    w1, b1 = _torch_like_linear_init(k1, mid, f_in)
    w2, b2 = _torch_like_linear_init(k2, f_out, mid)

    # One-time param prep (transpose + hidden-dim lane-pad + bf16 cast).
    prepared = prepare_linear_m_params(w1, b1, w2, b2)

    # jit the forward so any batch pad / row slice fuses with the kernel call.
    fwd = jax.jit(lambda xr: linear_m_forward(xr, prepared))
    out = jax.block_until_ready(fwd(x["real_vector"]))
    assert out.shape == (batch, f_out)

    # Reference 1: same bf16-input / f32-accumulate arithmetic as the kernel.
    # TODO(synk): bf16 matmul inputs are an intentional accuracy tradeoff vs
    # the PyTorch f32 reference; switch weights/x to f32 if tighter accuracy
    # is required.
    def _bf(a):
        return a.astype(jnp.bfloat16).astype(jnp.float32)
    h_ref = jnp.maximum(_bf(x["real_vector"]) @ _bf(w1).T + b1, 0.0)
    o_ref_bf16 = jnp.maximum(_bf(h_ref) @ _bf(w2).T + b2, 0.0)
    assert jnp.allclose(out, o_ref_bf16, atol=2e-3, rtol=2e-3)

    # Reference 2: pure f32 reference (loose tolerance for bf16 rounding).
    h32 = jnp.maximum(x["real_vector"] @ w1.T + b1, 0.0)
    o_ref_f32 = jnp.maximum(h32 @ w2.T + b2, 0.0)
    assert jnp.allclose(out, o_ref_f32, atol=5e-2, rtol=5e-2)

    print("KERNEL_OK")
</pallas_src>

<mosaic_0001>
module attributes {stable_mosaic.version = 11 : i64} {
  func.func @_mlp_kernel(%arg0: i32, %arg1: memref<8x24xf32, #tpu.memory_space<vmem>>, %arg2: memref<24x128xbf16, #tpu.memory_space<vmem>>, %arg3: memref<1x128xf32, #tpu.memory_space<vmem>>, %arg4: memref<128x16xbf16, #tpu.memory_space<vmem>>, %arg5: memref<1x16xf32, #tpu.memory_space<vmem>>, %arg6: memref<8x16xf32, #tpu.memory_space<vmem>>) attributes {dimension_semantics = [#tpu.dimension_semantics<parallel>], iteration_bounds = array<i64: 1>, scalar_prefetch = 0 : i64, scratch_operands = 0 : i64, tpu.core_type = #tpu.core_type<tc>, window_params = [{transform_indices = @transform_0, window_bounds = array<i64: 8, 24>}, {pipeline_mode = #tpu.pipeline_mode<synchronous>, transform_indices = @transform_1, window_bounds = array<i64: 24, 128>}, {pipeline_mode = #tpu.pipeline_mode<synchronous>, transform_indices = @transform_2, window_bounds = array<i64: 1, 128>}, {pipeline_mode = #tpu.pipeline_mode<synchronous>, transform_indices = @transform_3, window_bounds = array<i64: 128, 16>}, {pipeline_mode = #tpu.pipeline_mode<synchronous>, transform_indices = @transform_4, window_bounds = array<i64: 1, 16>}, {transform_indices = @transform_5, window_bounds = array<i64: 8, 16>}]} {
    %c0 = arith.constant 0 : index
    %c0_0 = arith.constant 0 : index
    %0 = vector.load %arg1[%c0, %c0_0] : memref<8x24xf32, #tpu.memory_space<vmem>>, vector<8x24xf32>
    %1 = arith.truncf %0 : vector<8x24xf32> to vector<8x24xbf16>
    %c0_1 = arith.constant 0 : index
    %c0_2 = arith.constant 0 : index
    %2 = vector.load %arg2[%c0_1, %c0_2] : memref<24x128xbf16, #tpu.memory_space<vmem>>, vector<24x128xbf16>
    %cst = arith.constant dense<0.000000e+00> : vector<8x128xf32>
    %3 = tpu.matmul %1, %2, %cst {dimension_numbers = #tpu.dot_dimension_numbers<[1], [0], [0], [1], [0, 0, 1, 1], [], []>} : vector<8x24xbf16>, vector<24x128xbf16>, vector<8x128xf32> -> vector<8x128xf32>
    %c0_3 = arith.constant 0 : index
    %c0_4 = arith.constant 0 : index
    %4 = vector.load %arg3[%c0_3, %c0_4] : memref<1x128xf32, #tpu.memory_space<vmem>>, vector<1x128xf32>
    %5 = vector.broadcast %4 : vector<1x128xf32> to vector<8x128xf32>
    %6 = arith.addf %3, %5 : vector<8x128xf32>
    %cst_5 = arith.constant 0.000000e+00 : f32
    %7 = vector.broadcast %cst_5 : f32 to vector<8x128xf32>
    %8 = arith.maximumf %6, %7 : vector<8x128xf32>
    %9 = arith.truncf %8 : vector<8x128xf32> to vector<8x128xbf16>
    %c0_6 = arith.constant 0 : index
    %c0_7 = arith.constant 0 : index
    %10 = vector.load %arg4[%c0_6, %c0_7] : memref<128x16xbf16, #tpu.memory_space<vmem>>, vector<128x16xbf16>
    %cst_8 = arith.constant dense<0.000000e+00> : vector<8x16xf32>
    %11 = tpu.matmul %9, %10, %cst_8 {dimension_numbers = #tpu.dot_dimension_numbers<[1], [0], [0], [1], [0, 0, 1, 1], [], []>} : vector<8x128xbf16>, vector<128x16xbf16>, vector<8x16xf32> -> vector<8x16xf32>
    %c0_9 = arith.constant 0 : index
    %c0_10 = arith.constant 0 : index
    %12 = vector.load %arg5[%c0_9, %c0_10] : memref<1x16xf32, #tpu.memory_space<vmem>>, vector<1x16xf32>
    %13 = vector.broadcast %12 : vector<1x16xf32> to vector<8x16xf32>
    %14 = arith.addf %11, %13 : vector<8x16xf32>
    %cst_11 = arith.constant 0.000000e+00 : f32
    %15 = vector.broadcast %cst_11 : f32 to vector<8x16xf32>
    %16 = arith.maximumf %14, %15 : vector<8x16xf32>
    %c0_12 = arith.constant 0 : index
    %c0_13 = arith.constant 0 : index
    %17 = vector.load %arg6[%c0_12, %c0_13] : memref<8x16xf32, #tpu.memory_space<vmem>>, vector<8x16xf32>
    tpu.vector_store %arg6[%c0_12, %c0_13], %16 {strides = array<i32>} : memref<8x16xf32, #tpu.memory_space<vmem>>, vector<8x16xf32>,
    return
  }
  func.func @transform_0(%arg0: i32) -> (i32, i32) {
    %c0_i32 = arith.constant 0 : i32
    %c0_i32_0 = arith.constant 0 : i32
    return %arg0, %c0_i32 : i32, i32
  }
  func.func @transform_1(%arg0: i32) -> (i32, i32) {
    %c0_i32 = arith.constant 0 : i32
    %c0_i32_0 = arith.constant 0 : i32
    %c0_i32_1 = arith.constant 0 : i32
    return %c0_i32, %c0_i32_0 : i32, i32
  }
  func.func @transform_2(%arg0: i32) -> (i32, i32) {
    %c0_i32 = arith.constant 0 : i32
    %c0_i32_0 = arith.constant 0 : i32
    %c0_i32_1 = arith.constant 0 : i32
    return %c0_i32, %c0_i32_0 : i32, i32
  }
  func.func @transform_3(%arg0: i32) -> (i32, i32) {
    %c0_i32 = arith.constant 0 : i32
    %c0_i32_0 = arith.constant 0 : i32
    %c0_i32_1 = arith.constant 0 : i32
    return %c0_i32, %c0_i32_0 : i32, i32
  }
  func.func @transform_4(%arg0: i32) -> (i32, i32) {
    %c0_i32 = arith.constant 0 : i32
    %c0_i32_0 = arith.constant 0 : i32
    %c0_i32_1 = arith.constant 0 : i32
    return %c0_i32, %c0_i32_0 : i32, i32
  }
  func.func @transform_5(%arg0: i32) -> (i32, i32) {
    %c0_i32 = arith.constant 0 : i32
    %c0_i32_0 = arith.constant 0 : i32
    return %arg0, %c0_i32 : i32, i32
  }
}

</mosaic_0001>

<llo_original>
// kernel: _lambda_.1
$region0: #{_lambda_.1}
  #allocation0 [shape = 'u32[]', space=smem, size = 0x4, offset = 0x4, fixed_abs, tag = 'smem constant byte address 0x4 - core index']
  #allocation1 [shape = 'u32[144,128]{1,0:T(1,128)}', space=vmem, size = 0x12000, scoped, tag = 'internal scratch']
  %s0 = inlined_call_operand.hbm [shape: f32[8,24], index: 0, kind: input, shape index: {}]
  %s1 = inlined_call_operand.hbm [shape: bf16[24,128], index: 1, kind: input, shape index: {}]
  %s2 = inlined_call_operand.vmem [shape: f32[1,128], index: 2, kind: input, shape index: {}]
  %s3 = inlined_call_operand.hbm [shape: bf16[128,16], index: 3, kind: input, shape index: {}]
  %s4 = inlined_call_operand.vmem [shape: f32[1,16], index: 4, kind: input, shape index: {}]
  %s5 = inlined_call_operand.hbm [shape: f32[8,16], index: 5, kind: output, shape index: {}]
  %s6 = sld [smem:[#allocation0]]
  $region42: #{_lambda_.1} parent=0
    _
  %s8 = ssub.s32 1, %s6
  %s9 = scalar_select 0, %s8, %s6
  $region1: #{_lambda_.1} parent=0
    #allocation2 [shape = 'u8[4096]{0}', space=vmem, size = 0x1000, scoped, tag = 'input window, operand 0, single buffered']
    #allocation3 [shape = 's32[1]{0}', space=sflag, size = 0x4, scoped, tag = 'scoped memory for _lambda_.1']
    #allocation4 [shape = 's32[1]{0}', space=sflag, size = 0x4, scoped, tag = 'scoped memory for _lambda_.1']
    #allocation5 [shape = 'u8[6144]{0}', space=vmem, size = 0x1800, scoped, tag = 'input window, operand 1, single buffered']
    #allocation6 [shape = 's32[1]{0}', space=sflag, size = 0x4, scoped, tag = 'scoped memory for _lambda_.1']
    #allocation7 [shape = 'u8[32768]{0}', space=vmem, size = 0x8000, scoped, tag = 'input window, operand 3, single buffered']
    #allocation8 [shape = 'u8[4096]{0}', space=vmem, size = 0x1000, scoped, tag = 'output window, operand 0, single buffered']
    %10 = vsyncpa [#allocation3], 0
    %11 = vsyncpa [#allocation6], 0
    %12 = vsyncpa [#allocation4], 0
    // Predicated region
    $region2: #{_lambda_.1} parent=1 // pred_check
      _
    $region3: #{_lambda_.1} parent=1 // pred_check_branch
      %14 = sbr.rel (0) target = $region5
    $region4: #{_lambda_.1} parent=1 // pred_region
      %s16 = ssub.s32 128, 128
      %17 = vsyncadd [#allocation3], %s16
      %s19 = sshll.u32 [#allocation2], 4
      %s20 = int_to_ptr.vmem [resolvable:$true] %s19
      %22 = dma.hbm_to_vmem [thread:$0]  %s0, 128, %s20, [#allocation3]
    $region5: #{_lambda_.1} parent=1 // pred_fallthru
      _
    // Predicated region
    $region6: #{_lambda_.1} parent=1 // pred_check
      _
    $region7: #{_lambda_.1} parent=1 // pred_check_branch
      %24 = sbr.rel (0) target = $region9
    $region8: #{_lambda_.1} parent=1 // pred_region
      %s26 = ssub.s32 192, 192
      %27 = vsyncadd [#allocation6], %s26
      %s28 = sshll.u32 [#allocation5], 4
      %s29 = int_to_ptr.vmem [resolvable:$true] %s28
      %34 = dma.hbm_to_vmem [thread:$0]  %s1, 192, %s29, [#allocation6], 64, 64, 4
    $region9: #{_lambda_.1} parent=1 // pred_fallthru
      _
    // Predicated region
    $region10: #{_lambda_.1} parent=1 // pred_check
      _
    $region11: #{_lambda_.1} parent=1 // pred_check_branch
      %36 = sbr.rel (0) target = $region13
    $region12: #{_lambda_.1} parent=1 // pred_region
      _
    $region13: #{_lambda_.1} parent=1 // pred_fallthru
      _
    // Predicated region
    $region14: #{_lambda_.1} parent=1 // pred_check
      _
    $region15: #{_lambda_.1} parent=1 // pred_check_branch
      %38 = sbr.rel (0) target = $region17
    $region16: #{_lambda_.1} parent=1 // pred_region
      %s40 = ssub.s32 1024, 1024
      %41 = vsyncadd [#allocation6], %s40
      %s42 = sshll.u32 [#allocation7], 4
      %s43 = int_to_ptr.vmem [resolvable:$true] %s42
      %48 = dma.hbm_to_vmem [thread:$0]  %s3, 1024, %s43, [#allocation6], 64, 64, 4
    $region17: #{_lambda_.1} parent=1 // pred_fallthru
      _
    // Predicated region
    $region18: #{_lambda_.1} parent=1 // pred_check
      _
    $region19: #{_lambda_.1} parent=1 // pred_check_branch
      %50 = sbr.rel (0) target = $region21
    $region20: #{_lambda_.1} parent=1 // pred_region
      _
    $region21: #{_lambda_.1} parent=1 // pred_fallthru
      _
    // Predicated region
    $region22: #{_lambda_.1} parent=1 // pred_check
      _
    $region23: #{_lambda_.1} parent=1 // pred_check_branch
      %52 = sbr.rel (0) target = $region25
    $region24: #{_lambda_.1} parent=1 // pred_region
      %53 = dma.done [#allocation3], 128
    $region25: #{_lambda_.1} parent=1 // pred_fallthru
      _
    // Predicated region
    $region26: #{_lambda_.1} parent=1 // pred_check
      _
    $region27: #{_lambda_.1} parent=1 // pred_check_branch
      %55 = sbr.rel (0) target = $region29
    $region28: #{_lambda_.1} parent=1 // pred_region
      %56 = dma.done [#allocation6], 192
    $region29: #{_lambda_.1} parent=1 // pred_fallthru
      _
    // Predicated region
    $region30: #{_lambda_.1} parent=1 // pred_check
      _
    $region31: #{_lambda_.1} parent=1 // pred_check_branch
      %58 = sbr.rel (0) target = $region33
    $region32: #{_lambda_.1} parent=1 // pred_region
      %59 = dma.done [#allocation6], 1024
    $region33: #{_lambda_.1} parent=1 // pred_fallthru
      _
    %v61 = vld [vmem:[#allocation2] sm:$0xff]
    %v62 = vpack.c.bf16 %v61, %v61
    %v63 = vld [vmem:[#allocation5] sm:$0xf]
    %v64 = vld [vmem:[#allocation5 + $0x4] sm:$0xf]
    %v65 = vld [vmem:[#allocation5 + $0x8] sm:$0xf]
    %v66 = vld [vmem:[%s2] sm:$0x1]
    %v68 = vlaneseq
    %v69 = vshrl.u32 %v68, 7
    %v70 = vsub.s32 0, %v69
    %v71 = vrot.slane %v66, %v70
    %v76 = vunpack.c.l.b16 %v63
    %v77 = vunpack.c.l.b16 %v64
    %v78 = vunpack.c.l.b16 %v65
    %v79 = vpack.c.b16 %v77, %v76
    %v80 = vpack.c.b16 %v78, %v78
    %vm82 = vcmask 195584
    %v84 = vsel %vm82, %v62, 0
    %vm86 = vcmask 1043456
    %v88 = vsel %vm86, %v80, 0
    %90 = vmatprep.subr.bf16.mxu0 0
    %91 = vmatpush1.bf16.msra.mxu0 0
    %92 = vmatprep.subr.bf16.mxu0 0
    %93 = vmatpush1.bf16.msra.mxu0 0
    %94 = vmatprep.subr.bf16.mxu0 0
    %95 = vmatpush1.bf16.msra.mxu0 0
    %96 = vmatprep.subr.bf16.mxu0 0
    %97 = vmatpush1.bf16.msra.mxu0 0
    %98 = vmatprep.subr.bf16.mxu0 0
    %99 = vmatpush1.bf16.msra.mxu0 0
    %100 = vmatprep.subr.bf16.mxu0 0
    %101 = vmatpush1.bf16.msra.mxu0 0
    %102 = vmatprep.subr.bf16.mxu0 0
    %103 = vmatpush1.bf16.msra.mxu0 %v88
    %104 = vmatprep.subr.bf16.mxu0 0
    %105 = vmatpush1.bf16.msra.mxu0 %v79
    %106 = vmatprep.subr.bf16.mxu0 0
    %107 = vmatpush2.bf16.msra.mxu0 0
    %108 = vmatprep.subr.bf16.mxu0 0
    %109 = vmatpush2.bf16.msra.mxu0 0
    %110 = vmatprep.subr.bf16.mxu0 0
    %111 = vmatpush2.bf16.msra.mxu0 0
    %112 = vmatprep.subr.bf16.mxu0 0
    %113 = vmatpush2.bf16.msra.mxu0 0
    %114 = vmatprep.subr.bf16.mxu0 0
    %115 = vmatpush2.bf16.msra.mxu0 0
    %116 = vmatprep.subr.bf16.mxu0 0
    %117 = vmatpush2.bf16.msra.mxu0 0
    %118 = vmatprep.subr.bf16.mxu0 0
    %119 = vmatpush2.bf16.msra.mxu0 0
    %120 = vmatprep.subr.bf16.mxu0 0
    %121 = vmatpush2.bf16.msra.mxu0 0
    %122 = vmatprep.mubr.bf16.mxu0 0
    %123 = vmatmul.mubr.bf16.gmra.mxu0 %v84
    %v124 = vpop.f32.mrf.mxu0
    %v125 = vadd.f32 %v71, %v124
    %v126 = vpop.f32.mrf.mxu0
    %v127 = vpop.f32.mrf.mxu0
    %v128 = vpop.f32.mrf.mxu0
    %129 = vdwg.mxu0
    %v130 = vmax.f32 %v125, 0.0
    %v131 = vpack.c.bf16 %v130, %v130
    %v132 = vld [vmem:[#allocation7] sm:$0xf]
    %v133 = vld [vmem:[#allocation7 + $0x4] sm:$0xf]
    %v134 = vld [vmem:[#allocation7 + $0x8] sm:$0xf]
    %v135 = vld [vmem:[#allocation7 + $0xc] sm:$0xf]
    %v136 = vld [vmem:[#allocation7 + $0x10] sm:$0xf]
    %v137 = vld [vmem:[#allocation7 + $0x14] sm:$0xf]
    %v138 = vld [vmem:[#allocation7 + $0x18] sm:$0xf]
    %v139 = vld [vmem:[#allocation7 + $0x1c] sm:$0xf]
    %v140 = vld [vmem:[#allocation7 + $0x20] sm:$0xf]
    %v141 = vld [vmem:[#allocation7 + $0x24] sm:$0xf]
    %v142 = vld [vmem:[#allocation7 + $0x28] sm:$0xf]
    %v143 = vld [vmem:[#allocation7 + $0x2c] sm:$0xf]
    %v144 = vld [vmem:[#allocation7 + $0x30] sm:$0xf]
    %v145 = vld [vmem:[#allocation7 + $0x34] sm:$0xf]
    %v146 = vld [vmem:[#allocation7 + $0x38] sm:$0xf]
    %v147 = vld [vmem:[#allocation7 + $0x3c] sm:$0xf]
    %v148 = vld [vmem:[%s4] sm:$0x1]
    %v150 = vlaneseq
    %v151 = vshrl.u32 %v150, 7
    %v152 = vsub.s32 0, %v151
    %v153 = vrot.slane %v148, %v152
    %v171 = vunpack.c.l.b16 %v132
    %v172 = vunpack.c.l.b16 %v133
    %v173 = vunpack.c.l.b16 %v134
    %v174 = vunpack.c.l.b16 %v135
    %v175 = vunpack.c.l.b16 %v136
    %v176 = vunpack.c.l.b16 %v137
    %v177 = vunpack.c.l.b16 %v138
    %v178 = vunpack.c.l.b16 %v139
    %v179 = vunpack.c.l.b16 %v140
    %v180 = vunpack.c.l.b16 %v141
    %v181 = vunpack.c.l.b16 %v142
    %v182 = vunpack.c.l.b16 %v143
    %v183 = vunpack.c.l.b16 %v144
    %v184 = vunpack.c.l.b16 %v145
    %v185 = vunpack.c.l.b16 %v146
    %v186 = vunpack.c.l.b16 %v147
    %v187 = vpack.c.b16 %v172, %v171
    %v188 = vpack.c.b16 %v174, %v173
    %v189 = vpack.c.b16 %v176, %v175
    %v190 = vpack.c.b16 %v178, %v177
    %v191 = vpack.c.b16 %v180, %v179
    %v192 = vpack.c.b16 %v182, %v181
    %v193 = vpack.c.b16 %v184, %v183
    %v194 = vpack.c.b16 %v186, %v185
    %203 = vmatprep.subr.bf16.mxu0 0
    %204 = vmatpush1.bf16.msra.mxu0 %v194
    %205 = vmatprep.subr.bf16.mxu0 0
    %206 = vmatpush1.bf16.msra.mxu0 %v193
    %207 = vmatprep.subr.bf16.mxu0 0
    %208 = vmatpush1.bf16.msra.mxu0 %v192
    %209 = vmatprep.subr.bf16.mxu0 0
    %210 = vmatpush1.bf16.msra.mxu0 %v191
    %211 = vmatprep.subr.bf16.mxu0 0
    %212 = vmatpush1.bf16.msra.mxu0 %v190
    %213 = vmatprep.subr.bf16.mxu0 0
    %214 = vmatpush1.bf16.msra.mxu0 %v189
    %215 = vmatprep.subr.bf16.mxu0 0
    %216 = vmatpush1.bf16.msra.mxu0 %v188
    %217 = vmatprep.subr.bf16.mxu0 0
    %218 = vmatpush1.bf16.msra.mxu0 %v187
    %219 = vmatprep.subr.bf16.mxu0 0
    %220 = vmatpush2.bf16.msra.mxu0 0
    %221 = vmatprep.subr.bf16.mxu0 0
    %222 = vmatpush2.bf16.msra.mxu0 0
    %223 = vmatprep.subr.bf16.mxu0 0
    %224 = vmatpush2.bf16.msra.mxu0 0
    %225 = vmatprep.subr.bf16.mxu0 0
    %226 = vmatpush2.bf16.msra.mxu0 0
    %227 = vmatprep.subr.bf16.mxu0 0
    %228 = vmatpush2.bf16.msra.mxu0 0
    %229 = vmatprep.subr.bf16.mxu0 0
    %230 = vmatpush2.bf16.msra.mxu0 0
    %231 = vmatprep.subr.bf16.mxu0 0
    %232 = vmatpush2.bf16.msra.mxu0 0
    %233 = vmatprep.subr.bf16.mxu0 0
    %234 = vmatpush2.bf16.msra.mxu0 0
    %235 = vmatprep.mubr.bf16.mxu0 0
    %236 = vmatmul.mubr.bf16.gmra.mxu0 %v131
    %v237 = vpop.f32.mrf.mxu0
    %v238 = vadd.f32 %v153, %v237
    %v239 = vpop.f32.mrf.mxu0
    %v240 = vpop.f32.mrf.mxu0
    %v241 = vpop.f32.mrf.mxu0
    %242 = vdwg.mxu0
    %v243 = vmax.f32 %v238, 0.0
    %vm244 = vcmask 130048
    %245 = vst.msk [vmem:[#allocation8] sm:$0xff] %vm244, %v243
    // Predicated region
    $region34: #{_lambda_.1} parent=1 // pred_check
      _
    $region35: #{_lambda_.1} parent=1 // pred_check_branch
      %247 = sbr.rel (0) target = $region37
    $region36: #{_lambda_.1} parent=1 // pred_region
      %s249 = ssub.s32 128, 128
      %250 = vsyncadd [#allocation4], %s249
      %s252 = sshll.u32 [#allocation8], 4
      %s253 = int_to_ptr.vmem [resolvable:$true] %s252
      %255 = dma.vmem_to_hbm [thread:$0]  %s253, 128, %s5, [#allocation4]
    $region37: #{_lambda_.1} parent=1 // pred_fallthru
      _
    // Predicated region
    $region38: #{_lambda_.1} parent=1 // pred_check
      _
    $region39: #{_lambda_.1} parent=1 // pred_check_branch
      %257 = sbr.rel (0) target = $region41
    $region40: #{_lambda_.1} parent=1 // pred_region
      %258 = dma.done [#allocation4], 128
    $region41: #{_lambda_.1} parent=1 // pred_fallthru
      _
    %259 = vsyncpa [#allocation3], 1
    %260 = vsyncpa [#allocation6], 1
    %261 = vsyncpa [#allocation4], 1

</llo_original>
